<compile_context>
chip_gen: v5e
topology: v5e:2x2
jax: 0.10.0
libtpu: 0.0.40
codegen_flags: <defaults>
</compile_context>

<pallas_src>
import math

import jax
import jax.numpy as jnp
from jax.experimental import pallas as pl
from jax.experimental.pallas import tpu as pltpu


def init_token_conv_weight(key, c_in: int, d_model: int) -> jnp.ndarray:
    """Kaiming-normal (fan_in, leaky_relu) init of the Conv1d weight (d_model, c_in, 3),
    matching nn.init.kaiming_normal_(mode='fan_in', nonlinearity='leaky_relu')."""
    fan_in = c_in * 3
    gain = math.sqrt(2.0 / (1.0 + 0.01 ** 2))  # leaky_relu default negative_slope=0.01
    std = gain / math.sqrt(fan_in)
    return std * jax.random.normal(key, (d_model, c_in, 3), dtype=jnp.float32)


def _token_conv_kernel(x_ref, w_ref, o_ref):
    """Fused 3-tap circular conv over a (tb, L, c_in) tile of whole sequences.

    x_ref: (tb, L, c_in)      f32   batch tile of full sequences
    w_ref: (3*c_in, d_model)  f32   fused tap-major weights, VMEM-resident across grid
    o_ref: (tb, L, d_model)   f32   output tile
    """
    tb, L, c_in = x_ref.shape
    d_model = o_ref.shape[-1]

    x = x_ref[...]                                    # (tb, L, c_in)
    # Circular +/-1 shifts along the sequence (sublane) axis, computed once per step
    # on the whole 3-D tile (must happen BEFORE the reshape so the wrap never crosses
    # sequence boundaries).
    x_prev = pltpu.roll(x, shift=1, axis=1)           # x[b, (l-1) % L, :]
    x_next = pltpu.roll(x, shift=L - 1, axis=1)       # x[b, (l+1) % L, :]

    # Fuse the three taps into one MXU matmul:
    #   (tb*L, 3*c_in) @ (3*c_in, d_model) -> (tb*L, d_model)
    lhs = jnp.concatenate([x_prev, x, x_next], axis=-1)   # (tb, L, 3*c_in), lane concat
    lhs = lhs.reshape(tb * L, 3 * c_in)                    # free when L % 8 == 0
    out = jnp.dot(lhs, w_ref[...], preferred_element_type=jnp.float32)

    # Single large, lane-dense store of the whole output block.
    o_ref[...] = out.reshape(tb, L, d_model).astype(o_ref.dtype)


def _pick_batch_tile(B: int, L: int, c_in: int, d_model: int,
                     rows_per_step: int, vmem_block_budget_bytes: int) -> int:
    """Largest batch-tile that (a) targets ~rows_per_step output rows per grid step and
    (b) keeps double-buffered input+output blocks under the VMEM budget."""
    bytes_per_b = 2 * (L * c_in + L * d_model) * 4          # x2 for double buffering
    tb_vmem = max(1, vmem_block_budget_bytes // max(bytes_per_b, 1))
    tb_rows = max(1, rows_per_step // max(L, 1))
    return max(1, min(B, tb_rows, tb_vmem))


def token_embedding(x: jnp.ndarray, weight: jnp.ndarray,
                    *, rows_per_step: int = 2048) -> jnp.ndarray:
    """x: (B, L, c_in) float; weight: (d_model, c_in, 3) Conv1d weight (torch layout).
    Returns (B, L, d_model) float32, identical to TokenEmbedding.forward."""
    B, L, c_in = x.shape
    d_model, c_in_w, ksize = weight.shape
    assert c_in_w == c_in and ksize == 3, "weight must be (d_model, c_in, 3)"
    assert L >= 2, "circular kernel-3 conv needs a sequence length >= 2"

    x = x.astype(jnp.float32)
    # (d_model, c_in, 3) -> (3, c_in, d_model) -> (3*c_in, d_model): row block k holds
    # tap k, matching the [x_prev, x, x_next] lane-concat order in the kernel.
    w_fused = jnp.transpose(weight.astype(jnp.float32), (2, 1, 0)).reshape(3 * c_in, d_model)

    # ~2048 output rows per step, capped so double-buffered blocks stay under ~32 MiB
    # (safe for v7x's 64 MiB physical VMEM; plenty of headroom on v5e/v6e).
    tb = _pick_batch_tile(B, L, c_in, d_model, rows_per_step,
                          vmem_block_budget_bytes=32 * 1024 * 1024)
    grid = (pl.cdiv(B, tb),)   # ragged last block is masked by Pallas -- no pad/slice

    out = pl.pallas_call(
        _token_conv_kernel,
        out_shape=jax.ShapeDtypeStruct((B, L, d_model), jnp.float32),
        grid_spec=pltpu.PrefetchScalarGridSpec(
            num_scalar_prefetch=0,
            grid=grid,
            in_specs=[
                pl.BlockSpec((tb, L, c_in), lambda i: (i, 0, 0)),          # seq tile
                pl.BlockSpec((3 * c_in, d_model), lambda i: (0, 0)),       # weights (resident)
            ],
            out_specs=pl.BlockSpec((tb, L, d_model), lambda i: (i, 0, 0)),
        ),
        compiler_params=pltpu.CompilerParams(
            dimension_semantics=("parallel",),
            vmem_limit_bytes=48 * 1024 * 1024,   # raise past v5e's 16 MiB default trap
        ),
    )(x, w_fused)

    return out


def ref_token_embedding(x: jnp.ndarray, weight: jnp.ndarray) -> jnp.ndarray:
    """Plain-JAX reference: circular-padded Conv1d, matching the PyTorch module."""
    xp = jnp.transpose(x, (0, 2, 1))                                     # (B, c_in, L)
    xp = jnp.concatenate([xp[:, :, -1:], xp, xp[:, :, :1]], axis=-1)     # circular pad 1
    out = jax.lax.conv_general_dilated(
        xp, weight, window_strides=(1,), padding="VALID",
        dimension_numbers=("NCH", "OIH", "NCH"),
        precision=jax.lax.Precision.HIGHEST)
    return jnp.transpose(out, (0, 2, 1))                                 # (B, L, d_model)


if __name__ == "__main__":
    B, L, c_in, d_model = 2, 16, 4, 32

    key = jax.random.PRNGKey(0)
    kx, kw = jax.random.split(key)
    x = jax.random.normal(kx, (B, L, c_in), dtype=jnp.float32)
    weight = init_token_conv_weight(kw, c_in, d_model)

    y = token_embedding(x, weight)
    y = jax.block_until_ready(y)

    ref = ref_token_embedding(x, weight)
    assert y.shape == (B, L, d_model)
    max_err = float(jnp.max(jnp.abs(y - ref)))
    # MXU f32 matmul uses a multi-pass bf16 decomposition -> not bit-identical to the
    # HIGHEST-precision conv reference, but well within this tolerance at these sizes.
    assert jnp.allclose(y, ref, atol=5e-4, rtol=5e-4), \
        f"mismatch vs reference conv, max abs err={max_err}"

    print("KERNEL_OK")
</pallas_src>

<mosaic_0001>
module attributes {stable_mosaic.version = 11 : i64} {
  func.func @_token_conv_kernel(%arg0: i32, %arg1: memref<2x16x4xf32, #tpu.memory_space<vmem>>, %arg2: memref<12x32xf32, #tpu.memory_space<vmem>>, %arg3: memref<2x16x32xf32, #tpu.memory_space<vmem>>) attributes {dimension_semantics = [#tpu.dimension_semantics<parallel>], iteration_bounds = array<i64: 1>, scalar_prefetch = 0 : i64, scratch_operands = 0 : i64, tpu.core_type = #tpu.core_type<tc>, window_params = [{transform_indices = @transform_0, window_bounds = array<i64: 2, 16, 4>}, {pipeline_mode = #tpu.pipeline_mode<synchronous>, transform_indices = @transform_1, window_bounds = array<i64: 12, 32>}, {transform_indices = @transform_2, window_bounds = array<i64: 2, 16, 32>}]} {
    %c0 = arith.constant 0 : index
    %c0_0 = arith.constant 0 : index
    %c0_1 = arith.constant 0 : index
    %0 = vector.load %arg1[%c0, %c0_0, %c0_1] : memref<2x16x4xf32, #tpu.memory_space<vmem>>, vector<2x16x4xf32>
    %c1_i32 = arith.constant 1 : i32
    %1 = tpu.dynamic_rotate %0 by %c1_i32 dim 1 : vector<2x16x4xf32>, i32 -> vector<2x16x4xf32>
    %c15_i32 = arith.constant 15 : i32
    %2 = tpu.dynamic_rotate %0 by %c15_i32 dim 1 : vector<2x16x4xf32>, i32 -> vector<2x16x4xf32>
    %3 = tpu.concatenate %1, %0, %2 in 2 : vector<2x16x4xf32>, vector<2x16x4xf32>, vector<2x16x4xf32> -> vector<2x16x12xf32>
    %4 = vector.shape_cast %3 : vector<2x16x12xf32> to vector<32x12xf32>
    %c0_2 = arith.constant 0 : index
    %c0_3 = arith.constant 0 : index
    %5 = vector.load %arg2[%c0_2, %c0_3] : memref<12x32xf32, #tpu.memory_space<vmem>>, vector<12x32xf32>
    %cst = arith.constant dense<0.000000e+00> : vector<32x32xf32>
    %6 = tpu.matmul %4, %5, %cst {dimension_numbers = #tpu.dot_dimension_numbers<[1], [0], [0], [1], [0, 0, 1, 1], [], []>} : vector<32x12xf32>, vector<12x32xf32>, vector<32x32xf32> -> vector<32x32xf32>
    %7 = vector.shape_cast %6 : vector<32x32xf32> to vector<2x16x32xf32>
    %c0_4 = arith.constant 0 : index
    %c0_5 = arith.constant 0 : index
    %c0_6 = arith.constant 0 : index
    %8 = vector.load %arg3[%c0_4, %c0_5, %c0_6] : memref<2x16x32xf32, #tpu.memory_space<vmem>>, vector<2x16x32xf32>
    tpu.vector_store %arg3[%c0_4, %c0_5, %c0_6], %7 {strides = array<i32>} : memref<2x16x32xf32, #tpu.memory_space<vmem>>, vector<2x16x32xf32>,
    return
  }
  func.func @transform_0(%arg0: i32) -> (i32, i32, i32) {
    %c0_i32 = arith.constant 0 : i32
    %c0_i32_0 = arith.constant 0 : i32
    %c0_i32_1 = arith.constant 0 : i32
    return %arg0, %c0_i32, %c0_i32_0 : i32, i32, i32
  }
  func.func @transform_1(%arg0: i32) -> (i32, i32) {
    %c0_i32 = arith.constant 0 : i32
    %c0_i32_0 = arith.constant 0 : i32
    %c0_i32_1 = arith.constant 0 : i32
    return %c0_i32, %c0_i32_0 : i32, i32
  }
  func.func @transform_2(%arg0: i32) -> (i32, i32, i32) {
    %c0_i32 = arith.constant 0 : i32
    %c0_i32_0 = arith.constant 0 : i32
    %c0_i32_1 = arith.constant 0 : i32
    return %arg0, %c0_i32, %c0_i32_0 : i32, i32, i32
  }
}

</mosaic_0001>

<llo_original>
// kernel: tpu_custom_call.1
$region0: #{tpu_custom_call.1}
  #allocation0 [shape = 'u32[]', space=smem, size = 0x4, offset = 0x4, fixed_abs, tag = 'smem constant byte address 0x4 - core index']
  #allocation1 [shape = 'u32[72,128]{1,0:T(1,128)}', space=vmem, size = 0x9000, scoped, tag = 'internal scratch']
  %s0 = inlined_call_operand.vmem [shape: f32[2,16,4], index: 0, kind: input, shape index: {}]
  %s1 = inlined_call_operand.vmem [shape: f32[12,32], index: 1, kind: input, shape index: {}]
  %s2 = inlined_call_operand.hbm [shape: f32[2,16,32], index: 2, kind: output, shape index: {}]
  %s3 = sld [smem:[#allocation0]]
  $region18: #{tpu_custom_call.1} parent=0
    _
  %s5 = ssub.s32 1, %s3
  %s6 = scalar_select 0, %s5, %s3
  $region1: #{tpu_custom_call.1} parent=0
    #allocation2 [shape = 'u8[16384]{0}', space=vmem, size = 0x4000, scoped, tag = 'output window, operand 0, single buffered']
    #allocation3 [shape = 's32[1]{0}', space=sflag, size = 0x4, scoped, tag = 'scoped memory for tpu_custom_call.1']
    %7 = vsyncpa [#allocation3], 0
    // Predicated region
    $region2: #{tpu_custom_call.1} parent=1 // pred_check
      _
    $region3: #{tpu_custom_call.1} parent=1 // pred_check_branch
      %9 = sbr.rel (0) target = $region5
    $region4: #{tpu_custom_call.1} parent=1 // pred_region
      _
    $region5: #{tpu_custom_call.1} parent=1 // pred_fallthru
      _
    // Predicated region
    $region6: #{tpu_custom_call.1} parent=1 // pred_check
      _
    $region7: #{tpu_custom_call.1} parent=1 // pred_check_branch
      %11 = sbr.rel (0) target = $region9
    $region8: #{tpu_custom_call.1} parent=1 // pred_region
      _
    $region9: #{tpu_custom_call.1} parent=1 // pred_fallthru
      _
    %v12 = vld [vmem:[%s0] sm:$0xff]
    %v13 = vld [vmem:[%s0 + $0x8] sm:$0xff]
    %v14 = vld [vmem:[%s0 + $0x10] sm:$0xff]
    %v15 = vld [vmem:[%s0 + $0x18] sm:$0xff]
    %v16 = vrot.slane %v12, 7
    %v17 = vrot.slane %v14, 7
    %v18 = vrot.slane %v13, 7
    %v19 = vrot.slane %v15, 7
    %v20 = vlaneseq
    %v21 = vshrl.u32 %v20, 7
    %vm22 = vcmp.lt.s32.totalorder %v21, 1
    %v23 = vsel %vm22, %v16, %v18
    %v24 = vsel %vm22, %v17, %v19
    %v25 = vsel %vm22, %v18, %v16
    %v26 = vsel %vm22, %v19, %v17
    %v27 = vrot.slane %v12, 1
    %v28 = vrot.slane %v14, 1
    %v29 = vrot.slane %v13, 1
    %v30 = vrot.slane %v15, 1
    %vm31 = vcmp.lt.s32.totalorder %v21, 7
    %v32 = vsel %vm31, %v27, %v29
    %v33 = vsel %vm31, %v28, %v30
    %v34 = vsel %vm31, %v29, %v27
    %v35 = vsel %vm31, %v30, %v28
    %40 = vrot.lane.b32.xlu0 %v12, 4
    %v41 = vpop.permute.xlu0 %40
    %42 = vrot.lane.b32.xlu0 %v13, 4
    %v43 = vpop.permute.xlu0 %42
    %44 = vrot.lane.b32.xlu0 %v14, 4
    %v45 = vpop.permute.xlu0 %44
    %46 = vrot.lane.b32.xlu0 %v15, 4
    %v47 = vpop.permute.xlu0 %46
    %56 = vrot.lane.b32.xlu0 %v32, 8
    %v57 = vpop.permute.xlu0 %56
    %58 = vrot.lane.b32.xlu0 %v34, 8
    %v59 = vpop.permute.xlu0 %58
    %60 = vrot.lane.b32.xlu0 %v33, 8
    %v61 = vpop.permute.xlu0 %60
    %62 = vrot.lane.b32.xlu0 %v35, 8
    %v63 = vpop.permute.xlu0 %62
    %vm68 = vcmask 31744
    %v69 = vsel %vm68, %v25, %v41
    %v70 = vsel %vm68, %v23, %v43
    %v71 = vsel %vm68, %v26, %v45
    %v72 = vsel %vm68, %v24, %v47
    %vm73 = vcmask 64512
    %v74 = vsel %vm73, %v69, %v57
    %v75 = vsel %vm73, %v70, %v59
    %v76 = vsel %vm73, %v71, %v61
    %v77 = vsel %vm73, %v72, %v63
    %v78 = vld [vmem:[%s1] sm:$0xff]
    %v79 = vld [vmem:[%s1 + $0x8] sm:$0xf]
    %vm80 = vcmask 97280
    %v82 = vsel %vm80, %v74, 0
    %v85 = vsel %vm80, %v75, 0
    %v88 = vsel %vm80, %v76, 0
    %v91 = vsel %vm80, %v77, 0
    %vm93 = vcmask 1043456
    %v95 = vsel %vm93, %v79, 0
    %97 = vmatpush.msra.mxu0 0.0
    %98 = vmatpush.msra.mxu0 0.0
    %99 = vmatpush.msra.mxu0 0.0
    %100 = vmatpush.msra.mxu0 0.0
    %101 = vmatpush.msra.mxu0 0.0
    %102 = vmatpush.msra.mxu0 0.0
    %103 = vmatpush.msra.mxu0 0.0
    %104 = vmatpush.msra.mxu0 0.0
    %105 = vmatpush.msra.mxu0 0.0
    %106 = vmatpush.msra.mxu0 0.0
    %107 = vmatpush.msra.mxu0 0.0
    %108 = vmatpush.msra.mxu0 0.0
    %109 = vmatpush.msra.mxu0 0.0
    %110 = vmatpush.msra.mxu0 0.0
    %111 = vmatpush.msra.mxu0 %v95
    %112 = vmatpush.msra.mxu0 %v78
    %113 = vmatmul.f32.gmra.mxu0 %v82
    %v114 = vpop.f32.mrf.mxu0
    %v115 = vadd.f32 0.0, %v114
    %116 = vmatmul.f32.gmra.mxu0 %v85
    %v117 = vpop.f32.mrf.mxu0
    %v118 = vadd.f32 0.0, %v117
    %119 = vmatmul.f32.gmra.mxu0 %v88
    %v120 = vpop.f32.mrf.mxu0
    %v121 = vadd.f32 0.0, %v120
    %122 = vmatmul.f32.gmra.mxu0 %v91
    %v123 = vpop.f32.mrf.mxu0
    %v124 = vadd.f32 0.0, %v123
    %125 = vdwg.mxu0
    %vm126 = vcmask 261120
    %127 = vst.msk [vmem:[#allocation2] sm:$0xff] %vm126, %v115
    %128 = vst.msk [vmem:[#allocation2 + $0x8] sm:$0xff] %vm126, %v118
    %129 = vst.msk [vmem:[#allocation2 + $0x10] sm:$0xff] %vm126, %v121
    %130 = vst.msk [vmem:[#allocation2 + $0x18] sm:$0xff] %vm126, %v124
    // Predicated region
    $region10: #{tpu_custom_call.1} parent=1 // pred_check
      _
    $region11: #{tpu_custom_call.1} parent=1 // pred_check_branch
      %132 = sbr.rel (0) target = $region13
    $region12: #{tpu_custom_call.1} parent=1 // pred_region
      %134 = vsyncadd [#allocation3], 0
      %s135 = sshll.u32 [#allocation2], 4
      %s136 = int_to_ptr.vmem [resolvable:$true] %s135
      %s137 = sshll.u32 %s2, 4
      %s138 = int_to_ptr.hbm [resolvable:$true] %s137
      %143 = dma.vmem_to_hbm [thread:$0]  %s136, 512, %s138, [#allocation3], 128, 128, 8
    $region13: #{tpu_custom_call.1} parent=1 // pred_fallthru
      _
    // Predicated region
    $region14: #{tpu_custom_call.1} parent=1 // pred_check
      _
    $region15: #{tpu_custom_call.1} parent=1 // pred_check_branch
      %145 = sbr.rel (0) target = $region17
    $region16: #{tpu_custom_call.1} parent=1 // pred_region
      %147 = dma.done [#allocation3], 512
    $region17: #{tpu_custom_call.1} parent=1 // pred_fallthru
      _
    %148 = vsyncpa [#allocation3], 1

</llo_original>
